<compile_context>
chip_gen: v5e
topology: v5e:2x2
jax: 0.10.0
libtpu: 0.0.40
codegen_flags: <defaults>
</compile_context>

<pallas_src>
import jax
import jax.numpy as jnp
from jax import lax
from jax.experimental import pallas as pl
from jax.experimental.pallas import tpu as pltpu

_LANES = 128
_DEFAULT_TILE_ROWS = 8192   # packed rows / grid step: 8192*128*4B = 4 MiB per x buffer
_MIN_SPLIT_ROWS = 4096      # above this, use >= 2 grid steps (v7x megacore sharding)


def _ceil_div(a, b):
    return -(-a // b)


def _round_up(x, m):
    return _ceil_div(x, m) * m


def _logreg_kernel(x_ref, w_ref, b_ref, o_ref):
    # x_ref: (TILE_R, PD)  streamed input tile (VMEM)
    # w_ref: (P, PD)       resident block-diagonal packed weight (VMEM)
    # b_ref: (1,)          scalar bias (SMEM)
    # o_ref: (P, TILE_R)   lane-dense output tile (VMEM)
    z = lax.dot_general(
        w_ref[...], x_ref[...],
        dimension_numbers=(((1,), (1,)), ((), ())),   # w @ x^T -> (P, TILE_R)
        preferred_element_type=jnp.float32,
    )
    # jax.nn.sigmoid: stable lowering; exp lands on the otherwise-idle EUP slot.
    o_ref[...] = jax.nn.sigmoid(z + b_ref[0]).astype(o_ref.dtype)


def logistic_regression_forward(x, w, b, *, tile_rows=_DEFAULT_TILE_ROWS):
    """x: (N, D) f32, w: (1, D) f32 (nn.Linear weight), b: (1,) f32 -> (N, 1) f32."""
    n, d = x.shape

    # Lane-dense packing: fold `pack` original rows into one packed row of
    # pack*d <= 128 lanes. Works for any d <= 128 (not only divisors of 128).
    pack = max(1, _LANES // d) if d <= _LANES else 1
    packed_d = d * pack

    rows_needed = _ceil_div(n, pack)          # packed rows of real data

    # Tile sizing: large HBM-bound tiles; balanced so the tail tile is not mostly
    # zero padding; >= 2 grid steps on moderate N so both v7x TensorCores work.
    # tile_r is a multiple of 128 so the (pack, tile_r) output blocks are lane-dense.
    n_tiles = max(_ceil_div(rows_needed, tile_rows),
                  2 if rows_needed >= _MIN_SPLIT_ROWS else 1)
    tile_r = _round_up(_ceil_div(rows_needed, n_tiles), _LANES)
    total_rows = tile_r * n_tiles
    n_padded = total_rows * pack

    if n_padded != n:
        x = jnp.pad(x, ((0, n_padded - n), (0, 0)))   # zero rows -> sliced off later
    x_packed = x.reshape(total_rows, packed_d)        # contiguous row-major: free

    # Block-diagonal packed weight (pack, packed_d): row c holds w on lanes
    # [c*d, (c+1)*d), zeros elsewhere, so (w_block @ x_packed^T)[c, r] equals the
    # dot of original row (r*pack + c) with w. Exact (no numeric change).
    w_flat = w.reshape(d).astype(x.dtype)
    if pack > 1:
        eye = jnp.eye(pack, dtype=x.dtype)
        w_block = (eye[:, :, None] * w_flat[None, None, :]).reshape(pack, packed_d)
    else:
        w_block = w_flat.reshape(1, d)

    b_smem = b.reshape(1).astype(jnp.float32)

    out_packed = pl.pallas_call(
        _logreg_kernel,
        out_shape=jax.ShapeDtypeStruct((pack, total_rows), jnp.float32),
        grid=(n_tiles,),
        in_specs=[
            pl.BlockSpec((tile_r, packed_d), lambda i: (i, 0)),   # streamed x tiles
            pl.BlockSpec((pack, packed_d), lambda i: (0, 0)),     # resident weight
            pl.BlockSpec(memory_space=pltpu.MemorySpace.SMEM),    # scalar bias
        ],
        out_specs=pl.BlockSpec((pack, tile_r), lambda i: (0, i)), # lane-dense output
        compiler_params=pltpu.CompilerParams(
            dimension_semantics=("parallel",),
        ),
        cost_estimate=pl.CostEstimate(
            flops=2 * n_padded * d,
            transcendentals=n_padded,
            bytes_accessed=n_padded * d * 4 + n_padded * 4,
        ),
    )(x_packed, w_block, b_smem)

    # (pack, total_rows) -> (n_padded, 1) in original row order; drop padding rows.
    return out_packed.T.reshape(n_padded, 1)[:n]


if __name__ == "__main__":
    key = jax.random.PRNGKey(0)
    k_x, k_w, k_b = jax.random.split(key, 3)

    batch = 8
    input_dim = 32  # D (== X_train.shape[1] in the reference)

    x = jax.random.normal(k_x, (batch, input_dim), dtype=jnp.float32)
    # nn.Linear(input_dim, 1): weight shape (1, input_dim), bias shape (1,)
    bound = 1.0 / (input_dim ** 0.5)
    w = jax.random.uniform(k_w, (1, input_dim), minval=-bound, maxval=bound,
                           dtype=jnp.float32)
    b = jax.random.uniform(k_b, (1,), minval=-bound, maxval=bound,
                           dtype=jnp.float32)

    out = logistic_regression_forward(x, w, b)
    jax.block_until_ready(out)

    ref = jax.nn.sigmoid(x @ w.T + b)
    assert out.shape == (batch, 1)
    assert jnp.allclose(out, ref, atol=1e-5, rtol=1e-5)

    # Extra sanity: N not divisible by the tile (exercises padding + balanced grid)
    # and D that does not divide 128 (exercises the pack=6, 120-lane path).
    x2 = jax.random.normal(k_x, (1000, 32), dtype=jnp.float32)
    out2 = logistic_regression_forward(x2, w, b)
    assert jnp.allclose(out2, jax.nn.sigmoid(x2 @ w.T + b), atol=1e-5, rtol=1e-5)

    x3 = jax.random.normal(k_x, (37, 20), dtype=jnp.float32)
    w3 = jax.random.uniform(k_w, (1, 20), minval=-bound, maxval=bound,
                            dtype=jnp.float32)
    out3 = logistic_regression_forward(x3, w3, b)
    assert jnp.allclose(out3, jax.nn.sigmoid(x3 @ w3.T + b), atol=1e-5, rtol=1e-5)

    print("KERNEL_OK")
</pallas_src>

<mosaic_0001>
module attributes {stable_mosaic.version = 11 : i64} {
  func.func @_logreg_kernel(%arg0: i32, %arg1: memref<128x128xf32, #tpu.memory_space<vmem>>, %arg2: memref<4x128xf32, #tpu.memory_space<vmem>>, %arg3: memref<1xf32, #tpu.memory_space<smem>>, %arg4: memref<4x128xf32, #tpu.memory_space<vmem>>) attributes {dimension_semantics = [#tpu.dimension_semantics<parallel>], iteration_bounds = array<i64: 1>, scalar_prefetch = 0 : i64, scratch_operands = 0 : i64, tpu.core_type = #tpu.core_type<tc>, window_params = [{transform_indices = @transform_0, window_bounds = array<i64: 128, 128>}, {pipeline_mode = #tpu.pipeline_mode<synchronous>, transform_indices = @transform_1, window_bounds = array<i64: 4, 128>}, {transform_indices = @transform_2, window_bounds = array<i64: 1>}, {transform_indices = @transform_3, window_bounds = array<i64: 4, 128>}]} {
    %c0 = arith.constant 0 : index
    %c0_0 = arith.constant 0 : index
    %0 = vector.load %arg2[%c0, %c0_0] : memref<4x128xf32, #tpu.memory_space<vmem>>, vector<4x128xf32>
    %c0_1 = arith.constant 0 : index
    %c0_2 = arith.constant 0 : index
    %1 = vector.load %arg1[%c0_1, %c0_2] : memref<128x128xf32, #tpu.memory_space<vmem>>, vector<128x128xf32>
    %cst = arith.constant dense<0.000000e+00> : vector<4x128xf32>
    %2 = tpu.matmul %0, %1, %cst {dimension_numbers = #tpu.dot_dimension_numbers<[1], [1], [0], [0], [0, 0, 1, 0], [], []>} : vector<4x128xf32>, vector<128x128xf32>, vector<4x128xf32> -> vector<4x128xf32>
    %c0_3 = arith.constant 0 : index
    %3 = memref.load %arg3[%c0_3] : memref<1xf32, #tpu.memory_space<smem>>
    %4 = vector.broadcast %3 : f32 to vector<4x128xf32>
    %5 = arith.addf %2, %4 : vector<4x128xf32>
    %6 = arith.negf %5 : vector<4x128xf32>
    %7 = math.exp %6 : vector<4x128xf32>
    %cst_4 = arith.constant 1.000000e+00 : f32
    %8 = vector.broadcast %cst_4 : f32 to vector<4x128xf32>
    %9 = arith.addf %8, %7 : vector<4x128xf32>
    %10 = arith.divf %8, %9 : vector<4x128xf32>
    %c0_5 = arith.constant 0 : index
    %c0_6 = arith.constant 0 : index
    %11 = vector.load %arg4[%c0_5, %c0_6] : memref<4x128xf32, #tpu.memory_space<vmem>>, vector<4x128xf32>
    tpu.vector_store %arg4[%c0_5, %c0_6], %10 {strides = array<i32>} : memref<4x128xf32, #tpu.memory_space<vmem>>, vector<4x128xf32>,
    return
  }
  func.func @transform_0(%arg0: i32) -> (i32, i32) {
    %c0_i32 = arith.constant 0 : i32
    %c0_i32_0 = arith.constant 0 : i32
    return %arg0, %c0_i32 : i32, i32
  }
  func.func @transform_1(%arg0: i32) -> (i32, i32) {
    %c0_i32 = arith.constant 0 : i32
    %c0_i32_0 = arith.constant 0 : i32
    %c0_i32_1 = arith.constant 0 : i32
    return %c0_i32, %c0_i32_0 : i32, i32
  }
  func.func @transform_2(%arg0: i32) -> i32 {
    %c0_i32 = arith.constant 0 : i32
    %c0_i32_0 = arith.constant 0 : i32
    return %c0_i32 : i32
  }
  func.func @transform_3(%arg0: i32) -> (i32, i32) {
    %c0_i32 = arith.constant 0 : i32
    %c0_i32_0 = arith.constant 0 : i32
    return %c0_i32, %arg0 : i32, i32
  }
}

</mosaic_0001>

<llo_original>
// kernel: tpu_custom_call.1
$region0: #{tpu_custom_call.1}
  #allocation0 [shape = 'u32[]', space=smem, size = 0x4, offset = 0x4, fixed_abs, tag = 'smem constant byte address 0x4 - core index']
  #allocation1 [shape = 'u32[72,128]{1,0:T(1,128)}', space=vmem, size = 0x9000, scoped, tag = 'internal scratch']
  #allocation2 [shape = 'f32[1]{0:T(128)S(6)}', space=smem, size = 0x200, scoped, tag = 'scoped memory for tpu_custom_call.1']
  %s0 = inlined_call_operand.hbm [shape: f32[128,128], index: 0, kind: input, shape index: {}]
  %s1 = inlined_call_operand.hbm [shape: f32[4,128], index: 1, kind: input, shape index: {}]
  %s2 = inlined_call_operand.<no memory space> [shape: f32[1], index: 2, kind: input, shape index: {}]
  %s3 = inlined_call_operand.hbm [shape: f32[4,128], index: 3, kind: output, shape index: {}]
  %s4 = sld [smem:[#allocation0]]
  $region30: #{tpu_custom_call.1} parent=0
    _
  %s6 = ssub.s32 1, %s4
  %s7 = scalar_select 0, %s6, %s4
  %8 = sst [smem:[#allocation2]] %s2
  $region1: #{tpu_custom_call.1} parent=0
    #allocation3 [shape = 'u8[65536]{0}', space=vmem, size = 0x10000, scoped, tag = 'input window, operand 0, single buffered']
    #allocation4 [shape = 's32[1]{0}', space=sflag, size = 0x4, scoped, tag = 'scoped memory for tpu_custom_call.1']
    #allocation5 [shape = 's32[1]{0}', space=sflag, size = 0x4, scoped, tag = 'scoped memory for tpu_custom_call.1']
    #allocation6 [shape = 'u8[2048]{0}', space=vmem, size = 0x800, scoped, tag = 'input window, operand 1, single buffered']
    #allocation7 [shape = 's32[1]{0}', space=sflag, size = 0x4, scoped, tag = 'scoped memory for tpu_custom_call.1']
    #allocation8 [shape = 'u8[2048]{0}', space=vmem, size = 0x800, scoped, tag = 'output window, operand 0, single buffered']
    %9 = vsyncpa [#allocation4], 0
    %10 = vsyncpa [#allocation7], 0
    %11 = vsyncpa [#allocation5], 0
    // Predicated region
    $region2: #{tpu_custom_call.1} parent=1 // pred_check
      _
    $region3: #{tpu_custom_call.1} parent=1 // pred_check_branch
      %13 = sbr.rel (0) target = $region5
    $region4: #{tpu_custom_call.1} parent=1 // pred_region
      %15 = vsyncadd [#allocation4], 0
      %s16 = sshll.u32 %s0, 4
      %s17 = int_to_ptr.hbm [resolvable:$true] %s16
      %s18 = sshll.u32 [#allocation3], 4
      %s19 = int_to_ptr.vmem [resolvable:$true] %s18
      %24 = dma.hbm_to_vmem [thread:$0]  %s17, 2048, %s19, [#allocation4], 128, 128, 8
    $region5: #{tpu_custom_call.1} parent=1 // pred_fallthru
      _
    // Predicated region
    $region6: #{tpu_custom_call.1} parent=1 // pred_check
      _
    $region7: #{tpu_custom_call.1} parent=1 // pred_check_branch
      %26 = sbr.rel (0) target = $region9
    $region8: #{tpu_custom_call.1} parent=1 // pred_region
      %28 = vsyncadd [#allocation7], 0
      %s30 = sshll.u32 %s1, 4
      %s31 = int_to_ptr.hbm [resolvable:$true] %s30
      %s32 = sshll.u32 [#allocation6], 4
      %s33 = int_to_ptr.vmem [resolvable:$true] %s32
      %35 = dma.hbm_to_vmem [thread:$0]  %s31, 64, %s33, [#allocation7]
    $region9: #{tpu_custom_call.1} parent=1 // pred_fallthru
      _
    // Predicated region
    $region10: #{tpu_custom_call.1} parent=1 // pred_check
      _
    $region11: #{tpu_custom_call.1} parent=1 // pred_check_branch
      %37 = sbr.rel (0) target = $region13
    $region12: #{tpu_custom_call.1} parent=1 // pred_region
      _
    $region13: #{tpu_custom_call.1} parent=1 // pred_fallthru
      _
    // Predicated region
    $region14: #{tpu_custom_call.1} parent=1 // pred_check
      _
    $region15: #{tpu_custom_call.1} parent=1 // pred_check_branch
      %39 = sbr.rel (0) target = $region17
    $region16: #{tpu_custom_call.1} parent=1 // pred_region
      %41 = dma.done [#allocation4], 2048
    $region17: #{tpu_custom_call.1} parent=1 // pred_fallthru
      _
    // Predicated region
    $region18: #{tpu_custom_call.1} parent=1 // pred_check
      _
    $region19: #{tpu_custom_call.1} parent=1 // pred_check_branch
      %43 = sbr.rel (0) target = $region21
    $region20: #{tpu_custom_call.1} parent=1 // pred_region
      %45 = dma.done [#allocation7], 64
    $region21: #{tpu_custom_call.1} parent=1 // pred_fallthru
      _
    %v46 = vld [vmem:[#allocation6] sm:$0xf]
    %v47 = vld [vmem:[#allocation3] sm:$0xff]
    %v48 = vld [vmem:[#allocation3 + $0x8] sm:$0xff]
    %v49 = vld [vmem:[#allocation3 + $0x10] sm:$0xff]
    %v50 = vld [vmem:[#allocation3 + $0x18] sm:$0xff]
    %v51 = vld [vmem:[#allocation3 + $0x20] sm:$0xff]
    %v52 = vld [vmem:[#allocation3 + $0x28] sm:$0xff]
    %v53 = vld [vmem:[#allocation3 + $0x30] sm:$0xff]
    %v54 = vld [vmem:[#allocation3 + $0x38] sm:$0xff]
    %v55 = vld [vmem:[#allocation3 + $0x40] sm:$0xff]
    %v56 = vld [vmem:[#allocation3 + $0x48] sm:$0xff]
    %v57 = vld [vmem:[#allocation3 + $0x50] sm:$0xff]
    %v58 = vld [vmem:[#allocation3 + $0x58] sm:$0xff]
    %v59 = vld [vmem:[#allocation3 + $0x60] sm:$0xff]
    %v60 = vld [vmem:[#allocation3 + $0x68] sm:$0xff]
    %v61 = vld [vmem:[#allocation3 + $0x70] sm:$0xff]
    %v62 = vld [vmem:[#allocation3 + $0x78] sm:$0xff]
    %s63 = sld [smem:[#allocation2]]
    %v64 = vstv %s63
    %65 = vmatpush.xpose.msra.mxu0 %v62
    %66 = vmatpush.xpose.msra.mxu0 %v61
    %67 = vmatpush.xpose.msra.mxu0 %v60
    %68 = vmatpush.xpose.msra.mxu0 %v59
    %69 = vmatpush.xpose.msra.mxu0 %v58
    %70 = vmatpush.xpose.msra.mxu0 %v57
    %71 = vmatpush.xpose.msra.mxu0 %v56
    %72 = vmatpush.xpose.msra.mxu0 %v55
    %73 = vmatpush.xpose.msra.mxu0 %v54
    %74 = vmatpush.xpose.msra.mxu0 %v53
    %75 = vmatpush.xpose.msra.mxu0 %v52
    %76 = vmatpush.xpose.msra.mxu0 %v51
    %77 = vmatpush.xpose.msra.mxu0 %v50
    %78 = vmatpush.xpose.msra.mxu0 %v49
    %79 = vmatpush.xpose.msra.mxu0 %v48
    %80 = vmatpush.xpose.msra.mxu0 %v47
    %81 = vmatmul.f32.gmra.mxu0 %v46
    %v82 = vpop.f32.mrf.mxu0
    %v83 = vadd.f32 %v64, %v82
    %84 = vdwg.mxu0
    %v85 = vxor.u32 %v83, 2147483648
    %v86 = vmul.f32 %v85, 1.442695
    %v87 = vpow.pop %v86
    %v88 = vadd.f32 %v87, 1.0
    %v89 = vrcp.pop %v88
    %v90 = vmul.f32 %v88, %v89
    %v91 = vsub.f32 1.0, %v90
    %v92 = vmul.f32 %v89, %v91
    %v93 = vadd.f32 %v89, %v92
    %vm94 = vweird.f32 %v88
    %vm95 = vweird.f32 %v89
    %vm96 = vmor %vm94, %vm95
    %v97 = vsel %vm96, %v89, %v93
    %v98 = vand.u32 2147483647, %v88
    %vm99 = vcmp.eq.f32.partialorder %v98, 8.507059e+37
    %v100 = vand.u32 %v88, 2147483648
    %v101 = vor.u32 1.1754944e-38, %v100
    %v102 = vsel %vm99, %v101, %v97
    %v103 = vmul.f32 1.0, %v102
    %104 = vst [vmem:[#allocation8] sm:$0xf] %v103
    // Predicated region
    $region22: #{tpu_custom_call.1} parent=1 // pred_check
      _
    $region23: #{tpu_custom_call.1} parent=1 // pred_check_branch
      %106 = sbr.rel (0) target = $region25
    $region24: #{tpu_custom_call.1} parent=1 // pred_region
      %108 = vsyncadd [#allocation5], 0
      %s110 = sshll.u32 [#allocation8], 4
      %s111 = int_to_ptr.vmem [resolvable:$true] %s110
      %s112 = sshll.u32 %s3, 4
      %s113 = int_to_ptr.hbm [resolvable:$true] %s112
      %115 = dma.vmem_to_hbm [thread:$0]  %s111, 64, %s113, [#allocation5]
    $region25: #{tpu_custom_call.1} parent=1 // pred_fallthru
      _
    // Predicated region
    $region26: #{tpu_custom_call.1} parent=1 // pred_check
      _
    $region27: #{tpu_custom_call.1} parent=1 // pred_check_branch
      %117 = sbr.rel (0) target = $region29
    $region28: #{tpu_custom_call.1} parent=1 // pred_region
      %119 = dma.done [#allocation5], 64
    $region29: #{tpu_custom_call.1} parent=1 // pred_fallthru
      _
    %120 = vsyncpa [#allocation4], 1
    %121 = vsyncpa [#allocation7], 1
    %122 = vsyncpa [#allocation5], 1

</llo_original>
